<compile_context>
chip_gen: v6e
topology: v6e:2x2x1
jax: 0.10.0
libtpu: 0.0.40
codegen_flags: <defaults>
</compile_context>

<pallas_src>
import functools

import jax
import jax.numpy as jnp
from jax import lax
from jax.experimental import pallas as pl
from jax.experimental.pallas import tpu as pltpu

LANE = 128      # TPU lane width; hidden dims (64/128) are padded to this.
SUBTILE = 256   # in-kernel row sub-chunk (bounds live activation ranges).
MIN_SPLIT = 256  # batches <= this run as a single tile (grid of 1).


def _round_up(v, m):
    return ((v + m - 1) // m) * m


def _pad2d(a, rows, cols):
    """Zero-pad a 2-D array up to (rows, cols)."""
    return jnp.pad(a, ((0, rows - a.shape[0]), (0, cols - a.shape[1])))


def ik_mlp_kernel(x_ref,
                  w1_ref, b1_ref,
                  w2_ref, b2_ref,
                  w3_ref, b3_ref,
                  w4_ref, b4_ref,
                  o_ref):
    """Fused 4-layer MLP for one batch tile.

    Matmuls accumulate in f32 on the MXU; bias-add / ReLU stay in f32 on the
    VPU (safe on v5e, which has no bf16 VALU).  Activations are cast to the
    weight dtype (f32 or bf16) only as MXU operands.  Only the first
    `output_dim` columns of the final layer are stored (narrow output).
    """
    tile = x_ref.shape[0]
    out_dim = o_ref.shape[1]
    wdt = w1_ref.dtype

    def compute(xb):
        h = xb.astype(wdt)
        h = jnp.dot(h, w1_ref[...], preferred_element_type=jnp.float32) + b1_ref[...]
        h = jnp.maximum(h, 0.0).astype(wdt)
        h = jnp.dot(h, w2_ref[...], preferred_element_type=jnp.float32) + b2_ref[...]
        h = jnp.maximum(h, 0.0).astype(wdt)
        h = jnp.dot(h, w3_ref[...], preferred_element_type=jnp.float32) + b3_ref[...]
        h = jnp.maximum(h, 0.0).astype(wdt)
        h = jnp.dot(h, w4_ref[...], preferred_element_type=jnp.float32) + b4_ref[...]
        return h  # (rows, LANE_padded) f32

    if tile >= 2 * SUBTILE and tile % SUBTILE == 0:
        # Sub-chunk the tile to bound live activation ranges (big DMA tile at
        # the BlockSpec level, small live working set inside the kernel).
        n_chunks = tile // SUBTILE

        def body(c, carry):
            r = pl.multiple_of(c * SUBTILE, SUBTILE)
            res = compute(x_ref[pl.ds(r, SUBTILE), :])
            o_ref[pl.ds(r, SUBTILE), :] = res[:, :out_dim].astype(o_ref.dtype)
            return carry

        lax.fori_loop(0, n_chunks, body, 0, unroll=True)
    else:
        res = compute(x_ref[...])
        o_ref[...] = res[:, :out_dim].astype(o_ref.dtype)


def pad_params(params, *, use_bf16=True):
    """Pad/cast parameters once (call outside the hot path).

    params : dict with w1..w4 as (in_features, out_features), b1..b4 as
             (1, out_features), all float32.
    Returns (padded_params, output_dim).  Hidden dims are zero-padded to 128
    lanes (exact: zero rows/cols contribute nothing, ReLU(0)=0).  Weights are
    cast to bf16 when use_bf16 (MXU operands); biases stay f32.
    """
    wdt = jnp.bfloat16 if use_bf16 else jnp.float32
    input_dim = params["w1"].shape[0]
    output_dim = params["w4"].shape[1]
    out_p = _round_up(output_dim, LANE)  # keep last matmul lane-dense on MXU

    padded = {
        "w1": _pad2d(params["w1"], input_dim, LANE).astype(wdt),  # (in, 128)
        "b1": _pad2d(params["b1"], 1, LANE).astype(jnp.float32),  # (1, 128)
        "w2": _pad2d(params["w2"], LANE, LANE).astype(wdt),       # (128, 128)
        "b2": _pad2d(params["b2"], 1, LANE).astype(jnp.float32),
        "w3": _pad2d(params["w3"], LANE, LANE).astype(wdt),       # (128, 128)
        "b3": _pad2d(params["b3"], 1, LANE).astype(jnp.float32),
        "w4": _pad2d(params["w4"], LANE, out_p).astype(wdt),      # (128, out_p)
        "b4": _pad2d(params["b4"], 1, out_p).astype(jnp.float32),
    }
    return padded, output_dim


@functools.partial(jax.jit, static_argnames=("output_dim", "batch_tile"))
def ik_mlp_forward(x, padded, *, output_dim, batch_tile=1024):
    """Fused IKMLPNet forward via a single pallas_call.

    x          : (B, input_dim) float32 (fed as-is; cast happens in-kernel).
    padded     : output of pad_params().
    output_dim : static int, true output width.
    batch_tile : max rows per grid step (multiple of 8).  Small batches
                 (<= 256) run as one tile; larger batches always get >= 2
                 grid steps so both v7x TensorCores are used.
    Note: with bf16 params (pad_params default) compare against an f32
    reference with ~few e-2 tolerance; with f32 params results match to 1e-5.
    """
    B, input_dim = x.shape
    assert batch_tile % 8 == 0, "batch_tile must be a multiple of 8"

    if B <= MIN_SPLIT:
        tile = B                       # single full-array block, grid of 1
        b_pad = B
        x_pad = x
    else:
        # keep the grid >= 2 steps (even split when possible) and the tile
        # as large as batch_tile allows.
        tile = min(batch_tile, _round_up(pl.cdiv(B, 2), 8))
        b_pad = _round_up(B, tile)
        x_pad = jnp.pad(x, ((0, b_pad - B), (0, 0))) if b_pad != B else x
    grid = (b_pad // tile,)

    # Constant index_map -> weights/biases stay resident in VMEM across grid
    # steps (no per-step re-DMA).  Total padded params < 0.2 MiB.
    def const_spec(arr):
        return pl.BlockSpec(arr.shape, lambda i: (0, 0))

    out = pl.pallas_call(
        ik_mlp_kernel,
        out_shape=jax.ShapeDtypeStruct((b_pad, output_dim), jnp.float32),
        grid_spec=pltpu.PrefetchScalarGridSpec(
            num_scalar_prefetch=0,
            grid=grid,
            in_specs=[
                pl.BlockSpec((tile, input_dim), lambda i: (i, 0)),
                const_spec(padded["w1"]), const_spec(padded["b1"]),
                const_spec(padded["w2"]), const_spec(padded["b2"]),
                const_spec(padded["w3"]), const_spec(padded["b3"]),
                const_spec(padded["w4"]), const_spec(padded["b4"]),
            ],
            out_specs=pl.BlockSpec((tile, output_dim), lambda i: (i, 0)),
        ),
        compiler_params=pltpu.CompilerParams(
            dimension_semantics=("parallel",),  # shards across v7x's 2 TCs
        ),
    )(x_pad,
      padded["w1"], padded["b1"],
      padded["w2"], padded["b2"],
      padded["w3"], padded["b3"],
      padded["w4"], padded["b4"])

    # Only batch padding (if any) needs trimming; output is already narrow.
    return out[:B] if b_pad != B else out


def init_params(key, input_dim, output_dim):
    """PyTorch-default-style nn.Linear init; weights stored as (in, out)."""
    dims = [input_dim, 64, 128, 64, output_dim]
    params = {}
    keys = jax.random.split(key, 8)
    for li in range(4):
        fan_in, fan_out = dims[li], dims[li + 1]
        bound = 1.0 / jnp.sqrt(float(fan_in))
        w = jax.random.uniform(keys[2 * li], (fan_in, fan_out),
                               minval=-bound, maxval=bound, dtype=jnp.float32)
        b = jax.random.uniform(keys[2 * li + 1], (1, fan_out),
                               minval=-bound, maxval=bound, dtype=jnp.float32)
        params[f"w{li + 1}"] = w
        params[f"b{li + 1}"] = b
    return params


def reference_forward(x, params):
    """Pure-JAX reference (same math as the PyTorch module)."""
    h = x
    h = jnp.maximum(h @ params["w1"] + params["b1"], 0.0)
    h = jnp.maximum(h @ params["w2"] + params["b2"], 0.0)
    h = jnp.maximum(h @ params["w3"] + params["b3"], 0.0)
    return h @ params["w4"] + params["b4"]


if __name__ == "__main__":
    key = jax.random.PRNGKey(0)
    k_param, k_x, k_x2 = jax.random.split(key, 3)

    # IK-style problem: 12-D end-effector pose features -> 8 joint angles.
    input_dim, output_dim = 12, 8
    params = init_params(k_param, input_dim, output_dim)

    # --- Exact f32 path, deployment-like small batch (single tile, no grid) ---
    padded_f32, out_dim = pad_params(params, use_bf16=False)
    x_small = jax.random.normal(k_x, (16, input_dim), dtype=jnp.float32)
    out_small = jax.block_until_ready(
        ik_mlp_forward(x_small, padded_f32, output_dim=out_dim))
    ref_small = reference_forward(x_small, params)
    assert out_small.shape == (16, output_dim)
    assert jnp.allclose(out_small, ref_small, atol=1e-5, rtol=1e-5), \
        "f32 small-batch mismatch vs reference"

    # --- Default bf16 MXU path, gridded (2 tiles -> both v7x TensorCores) ---
    padded_bf16, _ = pad_params(params, use_bf16=True)
    x_large = jax.random.normal(k_x2, (1024, input_dim), dtype=jnp.float32)
    out_large = jax.block_until_ready(
        ik_mlp_forward(x_large, padded_bf16, output_dim=out_dim,
                       batch_tile=512))
    ref_large = reference_forward(x_large, params)
    assert out_large.shape == (1024, output_dim)
    assert jnp.allclose(out_large, ref_large, atol=5e-2, rtol=5e-2), \
        "bf16 large-batch mismatch vs reference (beyond bf16 tolerance)"

    print("KERNEL_OK")
</pallas_src>

<mosaic_0001>
module attributes {stable_mosaic.version = 11 : i64} {
  func.func @ik_mlp_kernel(%arg0: i32, %arg1: memref<16x12xf32, #tpu.memory_space<vmem>>, %arg2: memref<12x128xf32, #tpu.memory_space<vmem>>, %arg3: memref<1x128xf32, #tpu.memory_space<vmem>>, %arg4: memref<128x128xf32, #tpu.memory_space<vmem>>, %arg5: memref<1x128xf32, #tpu.memory_space<vmem>>, %arg6: memref<128x128xf32, #tpu.memory_space<vmem>>, %arg7: memref<1x128xf32, #tpu.memory_space<vmem>>, %arg8: memref<128x128xf32, #tpu.memory_space<vmem>>, %arg9: memref<1x128xf32, #tpu.memory_space<vmem>>, %arg10: memref<16x8xf32, #tpu.memory_space<vmem>>) attributes {dimension_semantics = [#tpu.dimension_semantics<parallel>], iteration_bounds = array<i64: 1>, scalar_prefetch = 0 : i64, scratch_operands = 0 : i64, tpu.core_type = #tpu.core_type<tc>, window_params = [{transform_indices = @transform_0, window_bounds = array<i64: 16, 12>}, {pipeline_mode = #tpu.pipeline_mode<synchronous>, transform_indices = @transform_1, window_bounds = array<i64: 12, 128>}, {pipeline_mode = #tpu.pipeline_mode<synchronous>, transform_indices = @transform_2, window_bounds = array<i64: 1, 128>}, {pipeline_mode = #tpu.pipeline_mode<synchronous>, transform_indices = @transform_3, window_bounds = array<i64: 128, 128>}, {pipeline_mode = #tpu.pipeline_mode<synchronous>, transform_indices = @transform_4, window_bounds = array<i64: 1, 128>}, {pipeline_mode = #tpu.pipeline_mode<synchronous>, transform_indices = @transform_5, window_bounds = array<i64: 128, 128>}, {pipeline_mode = #tpu.pipeline_mode<synchronous>, transform_indices = @transform_6, window_bounds = array<i64: 1, 128>}, {pipeline_mode = #tpu.pipeline_mode<synchronous>, transform_indices = @transform_7, window_bounds = array<i64: 128, 128>}, {pipeline_mode = #tpu.pipeline_mode<synchronous>, transform_indices = @transform_8, window_bounds = array<i64: 1, 128>}, {transform_indices = @transform_9, window_bounds = array<i64: 16, 8>}]} {
    %c0 = arith.constant 0 : index
    %c0_0 = arith.constant 0 : index
    %0 = vector.load %arg1[%c0, %c0_0] : memref<16x12xf32, #tpu.memory_space<vmem>>, vector<16x12xf32>
    %c0_1 = arith.constant 0 : index
    %c0_2 = arith.constant 0 : index
    %1 = vector.load %arg2[%c0_1, %c0_2] : memref<12x128xf32, #tpu.memory_space<vmem>>, vector<12x128xf32>
    %cst = arith.constant dense<0.000000e+00> : vector<16x128xf32>
    %2 = tpu.matmul %0, %1, %cst {dimension_numbers = #tpu.dot_dimension_numbers<[1], [0], [0], [1], [0, 0, 1, 1], [], []>} : vector<16x12xf32>, vector<12x128xf32>, vector<16x128xf32> -> vector<16x128xf32>
    %c0_3 = arith.constant 0 : index
    %c0_4 = arith.constant 0 : index
    %3 = vector.load %arg3[%c0_3, %c0_4] : memref<1x128xf32, #tpu.memory_space<vmem>>, vector<1x128xf32>
    %4 = vector.broadcast %3 : vector<1x128xf32> to vector<16x128xf32>
    %5 = arith.addf %2, %4 : vector<16x128xf32>
    %cst_5 = arith.constant 0.000000e+00 : f32
    %6 = vector.broadcast %cst_5 : f32 to vector<16x128xf32>
    %7 = arith.maximumf %5, %6 : vector<16x128xf32>
    %c0_6 = arith.constant 0 : index
    %c0_7 = arith.constant 0 : index
    %8 = vector.load %arg4[%c0_6, %c0_7] : memref<128x128xf32, #tpu.memory_space<vmem>>, vector<128x128xf32>
    %cst_8 = arith.constant dense<0.000000e+00> : vector<16x128xf32>
    %9 = tpu.matmul %7, %8, %cst_8 {dimension_numbers = #tpu.dot_dimension_numbers<[1], [0], [0], [1], [0, 0, 1, 1], [], []>} : vector<16x128xf32>, vector<128x128xf32>, vector<16x128xf32> -> vector<16x128xf32>
    %c0_9 = arith.constant 0 : index
    %c0_10 = arith.constant 0 : index
    %10 = vector.load %arg5[%c0_9, %c0_10] : memref<1x128xf32, #tpu.memory_space<vmem>>, vector<1x128xf32>
    %11 = vector.broadcast %10 : vector<1x128xf32> to vector<16x128xf32>
    %12 = arith.addf %9, %11 : vector<16x128xf32>
    %cst_11 = arith.constant 0.000000e+00 : f32
    %13 = vector.broadcast %cst_11 : f32 to vector<16x128xf32>
    %14 = arith.maximumf %12, %13 : vector<16x128xf32>
    %c0_12 = arith.constant 0 : index
    %c0_13 = arith.constant 0 : index
    %15 = vector.load %arg6[%c0_12, %c0_13] : memref<128x128xf32, #tpu.memory_space<vmem>>, vector<128x128xf32>
    %cst_14 = arith.constant dense<0.000000e+00> : vector<16x128xf32>
    %16 = tpu.matmul %14, %15, %cst_14 {dimension_numbers = #tpu.dot_dimension_numbers<[1], [0], [0], [1], [0, 0, 1, 1], [], []>} : vector<16x128xf32>, vector<128x128xf32>, vector<16x128xf32> -> vector<16x128xf32>
    %c0_15 = arith.constant 0 : index
    %c0_16 = arith.constant 0 : index
    %17 = vector.load %arg7[%c0_15, %c0_16] : memref<1x128xf32, #tpu.memory_space<vmem>>, vector<1x128xf32>
    %18 = vector.broadcast %17 : vector<1x128xf32> to vector<16x128xf32>
    %19 = arith.addf %16, %18 : vector<16x128xf32>
    %cst_17 = arith.constant 0.000000e+00 : f32
    %20 = vector.broadcast %cst_17 : f32 to vector<16x128xf32>
    %21 = arith.maximumf %19, %20 : vector<16x128xf32>
    %c0_18 = arith.constant 0 : index
    %c0_19 = arith.constant 0 : index
    %22 = vector.load %arg8[%c0_18, %c0_19] : memref<128x128xf32, #tpu.memory_space<vmem>>, vector<128x128xf32>
    %cst_20 = arith.constant dense<0.000000e+00> : vector<16x128xf32>
    %23 = tpu.matmul %21, %22, %cst_20 {dimension_numbers = #tpu.dot_dimension_numbers<[1], [0], [0], [1], [0, 0, 1, 1], [], []>} : vector<16x128xf32>, vector<128x128xf32>, vector<16x128xf32> -> vector<16x128xf32>
    %c0_21 = arith.constant 0 : index
    %c0_22 = arith.constant 0 : index
    %24 = vector.load %arg9[%c0_21, %c0_22] : memref<1x128xf32, #tpu.memory_space<vmem>>, vector<1x128xf32>
    %25 = vector.broadcast %24 : vector<1x128xf32> to vector<16x128xf32>
    %26 = arith.addf %23, %25 : vector<16x128xf32>
    %27 = vector.extract_strided_slice %26 {offsets = [0, 0], sizes = [16, 8], strides = [1, 1]} : vector<16x128xf32> to vector<16x8xf32>
    %c0_23 = arith.constant 0 : index
    %c0_24 = arith.constant 0 : index
    %28 = vector.load %arg10[%c0_23, %c0_24] : memref<16x8xf32, #tpu.memory_space<vmem>>, vector<16x8xf32>
    tpu.vector_store %arg10[%c0_23, %c0_24], %27 {strides = array<i32>} : memref<16x8xf32, #tpu.memory_space<vmem>>, vector<16x8xf32>,
    return
  }
  func.func @transform_0(%arg0: i32) -> (i32, i32) {
    %c0_i32 = arith.constant 0 : i32
    %c0_i32_0 = arith.constant 0 : i32
    return %arg0, %c0_i32 : i32, i32
  }
  func.func @transform_1(%arg0: i32) -> (i32, i32) {
    %c0_i32 = arith.constant 0 : i32
    %c0_i32_0 = arith.constant 0 : i32
    %c0_i32_1 = arith.constant 0 : i32
    return %c0_i32, %c0_i32_0 : i32, i32
  }
  func.func @transform_2(%arg0: i32) -> (i32, i32) {
    %c0_i32 = arith.constant 0 : i32
    %c0_i32_0 = arith.constant 0 : i32
    %c0_i32_1 = arith.constant 0 : i32
    return %c0_i32, %c0_i32_0 : i32, i32
  }
  func.func @transform_3(%arg0: i32) -> (i32, i32) {
    %c0_i32 = arith.constant 0 : i32
    %c0_i32_0 = arith.constant 0 : i32
    %c0_i32_1 = arith.constant 0 : i32
    return %c0_i32, %c0_i32_0 : i32, i32
  }
  func.func @transform_4(%arg0: i32) -> (i32, i32) {
    %c0_i32 = arith.constant 0 : i32
    %c0_i32_0 = arith.constant 0 : i32
    %c0_i32_1 = arith.constant 0 : i32
    return %c0_i32, %c0_i32_0 : i32, i32
  }
  func.func @transform_5(%arg0: i32) -> (i32, i32) {
    %c0_i32 = arith.constant 0 : i32
    %c0_i32_0 = arith.constant 0 : i32
    %c0_i32_1 = arith.constant 0 : i32
    return %c0_i32, %c0_i32_0 : i32, i32
  }
  func.func @transform_6(%arg0: i32) -> (i32, i32) {
    %c0_i32 = arith.constant 0 : i32
    %c0_i32_0 = arith.constant 0 : i32
    %c0_i32_1 = arith.constant 0 : i32
    return %c0_i32, %c0_i32_0 : i32, i32
  }
  func.func @transform_7(%arg0: i32) -> (i32, i32) {
    %c0_i32 = arith.constant 0 : i32
    %c0_i32_0 = arith.constant 0 : i32
    %c0_i32_1 = arith.constant 0 : i32
    return %c0_i32, %c0_i32_0 : i32, i32
  }
  func.func @transform_8(%arg0: i32) -> (i32, i32) {
    %c0_i32 = arith.constant 0 : i32
    %c0_i32_0 = arith.constant 0 : i32
    %c0_i32_1 = arith.constant 0 : i32
    return %c0_i32, %c0_i32_0 : i32, i32
  }
  func.func @transform_9(%arg0: i32) -> (i32, i32) {
    %c0_i32 = arith.constant 0 : i32
    %c0_i32_0 = arith.constant 0 : i32
    return %arg0, %c0_i32 : i32, i32
  }
}

</mosaic_0001>

<llo_original>
// kernel: ik_mlp_forward.1
$region0: #{ik_mlp_forward.1}
  #allocation0 [shape = 'u32[]', space=smem, size = 0x4, offset = 0x4, fixed_abs, tag = 'smem constant byte address 0x4 - core index']
  #allocation1 [shape = 'u32[144,128]{1,0:T(1,128)}', space=vmem, size = 0x12000, scoped, tag = 'internal scratch']
  %s0 = inlined_call_operand.hbm [shape: f32[16,12], index: 0, kind: input, shape index: {}]
  %s1 = inlined_call_operand.hbm [shape: f32[12,128], index: 1, kind: input, shape index: {}]
  %s2 = inlined_call_operand.vmem [shape: f32[1,128], index: 2, kind: input, shape index: {}]
  %s3 = inlined_call_operand.hbm [shape: f32[128,128], index: 3, kind: input, shape index: {}]
  %s4 = inlined_call_operand.vmem [shape: f32[1,128], index: 4, kind: input, shape index: {}]
  %s5 = inlined_call_operand.hbm [shape: f32[128,128], index: 5, kind: input, shape index: {}]
  %s6 = inlined_call_operand.vmem [shape: f32[1,128], index: 6, kind: input, shape index: {}]
  %s7 = inlined_call_operand.hbm [shape: f32[128,128], index: 7, kind: input, shape index: {}]
  %s8 = inlined_call_operand.vmem [shape: f32[1,128], index: 8, kind: input, shape index: {}]
  %s9 = inlined_call_operand.vmem [shape: f32[16,8], index: 9, kind: output, shape index: {}]
  %s10 = sld [smem:[#allocation0]]
  $region66: #{ik_mlp_forward.1} parent=0
    _
  %s12 = ssub.s32 1, %s10
  %s13 = scalar_select 0, %s12, %s10
  $region1: #{ik_mlp_forward.1} parent=0
    #allocation2 [shape = 'u8[8192]{0}', space=vmem, size = 0x2000, scoped, tag = 'input window, operand 0, single buffered']
    #allocation3 [shape = 's32[1]{0}', space=sflag, size = 0x4, scoped, tag = 'scoped memory for ik_mlp_forward.1']
    #allocation4 [shape = 'u8[8192]{0}', space=vmem, size = 0x2000, scoped, tag = 'input window, operand 1, single buffered']
    #allocation5 [shape = 's32[1]{0}', space=sflag, size = 0x4, scoped, tag = 'scoped memory for ik_mlp_forward.1']
    #allocation6 [shape = 'u8[65536]{0}', space=vmem, size = 0x10000, scoped, tag = 'input window, operand 3, single buffered']
    #allocation7 [shape = 'u8[65536]{0}', space=vmem, size = 0x10000, scoped, tag = 'input window, operand 5, single buffered']
    #allocation8 [shape = 's32[1]{0}', space=sflag, size = 0x4, scoped, tag = 'scoped memory for ik_mlp_forward.1']
    #allocation9 [shape = 'u8[65536]{0}', space=vmem, size = 0x10000, scoped, tag = 'input window, operand 7, single buffered']
    %14 = vsyncpa [#allocation3], 0
    %15 = vsyncpa [#allocation5], 0
    %16 = vsyncpa [#allocation8], 0
    // Predicated region
    $region2: #{ik_mlp_forward.1} parent=1 // pred_check
      _
    $region3: #{ik_mlp_forward.1} parent=1 // pred_check_branch
      %18 = sbr.rel (0) target = $region5
    $region4: #{ik_mlp_forward.1} parent=1 // pred_region
      %s20 = ssub.s32 256, 256
      %21 = vsyncadd [#allocation3], %s20
      %s22 = sshll.u32 [#allocation2], 4
      %s23 = int_to_ptr.vmem [resolvable:$true] %s22
      %28 = dma.hbm_to_vmem [thread:$0]  %s0, 256, %s23, [#allocation3], 128, 128, 8
    $region5: #{ik_mlp_forward.1} parent=1 // pred_fallthru
      _
    // Predicated region
    $region6: #{ik_mlp_forward.1} parent=1 // pred_check
      _
    $region7: #{ik_mlp_forward.1} parent=1 // pred_check_branch
      %30 = sbr.rel (0) target = $region9
    $region8: #{ik_mlp_forward.1} parent=1 // pred_region
      %s32 = ssub.s32 256, 256
      %33 = vsyncadd [#allocation5], %s32
      %s34 = sshll.u32 [#allocation4], 4
      %s35 = int_to_ptr.vmem [resolvable:$true] %s34
      %40 = dma.hbm_to_vmem [thread:$0]  %s1, 256, %s35, [#allocation5], 128, 128, 8
    $region9: #{ik_mlp_forward.1} parent=1 // pred_fallthru
      _
    // Predicated region
    $region10: #{ik_mlp_forward.1} parent=1 // pred_check
      _
    $region11: #{ik_mlp_forward.1} parent=1 // pred_check_branch
      %42 = sbr.rel (0) target = $region13
    $region12: #{ik_mlp_forward.1} parent=1 // pred_region
      _
    $region13: #{ik_mlp_forward.1} parent=1 // pred_fallthru
      _
    // Predicated region
    $region14: #{ik_mlp_forward.1} parent=1 // pred_check
      _
    $region15: #{ik_mlp_forward.1} parent=1 // pred_check_branch
      %44 = sbr.rel (0) target = $region17
    $region16: #{ik_mlp_forward.1} parent=1 // pred_region
      %s46 = ssub.s32 2048, 2048
      %47 = vsyncadd [#allocation5], %s46
      %s48 = sshll.u32 [#allocation6], 4
      %s49 = int_to_ptr.vmem [resolvable:$true] %s48
      %54 = dma.hbm_to_vmem [thread:$0]  %s3, 2048, %s49, [#allocation5], 128, 128, 8
    $region17: #{ik_mlp_forward.1} parent=1 // pred_fallthru
      _
    // Predicated region
    $region18: #{ik_mlp_forward.1} parent=1 // pred_check
      _
    $region19: #{ik_mlp_forward.1} parent=1 // pred_check_branch
      %56 = sbr.rel (0) target = $region21
    $region20: #{ik_mlp_forward.1} parent=1 // pred_region
      _
    $region21: #{ik_mlp_forward.1} parent=1 // pred_fallthru
      _
    // Predicated region
    $region22: #{ik_mlp_forward.1} parent=1 // pred_check
      _
    $region23: #{ik_mlp_forward.1} parent=1 // pred_check_branch
      %58 = sbr.rel (0) target = $region25
    $region24: #{ik_mlp_forward.1} parent=1 // pred_region
      %s60 = ssub.s32 2048, 2048
      %61 = vsyncadd [#allocation8], %s60
      %s62 = sshll.u32 [#allocation7], 4
      %s63 = int_to_ptr.vmem [resolvable:$true] %s62
      %68 = dma.hbm_to_vmem [thread:$0]  %s5, 2048, %s63, [#allocation8], 128, 128, 8
    $region25: #{ik_mlp_forward.1} parent=1 // pred_fallthru
      _
    // Predicated region
    $region26: #{ik_mlp_forward.1} parent=1 // pred_check
      _
    $region27: #{ik_mlp_forward.1} parent=1 // pred_check_branch
      %70 = sbr.rel (0) target = $region29
    $region28: #{ik_mlp_forward.1} parent=1 // pred_region
      _
    $region29: #{ik_mlp_forward.1} parent=1 // pred_fallthru
      _
    // Predicated region
    $region30: #{ik_mlp_forward.1} parent=1 // pred_check
      _
    $region31: #{ik_mlp_forward.1} parent=1 // pred_check_branch
      %72 = sbr.rel (0) target = $region33
    $region32: #{ik_mlp_forward.1} parent=1 // pred_region
      %s74 = ssub.s32 2048, 2048
      %75 = vsyncadd [#allocation8], %s74
      %s76 = sshll.u32 [#allocation9], 4
      %s77 = int_to_ptr.vmem [resolvable:$true] %s76
      %82 = dma.hbm_to_vmem [thread:$0]  %s7, 2048, %s77, [#allocation8], 128, 128, 8
    $region33: #{ik_mlp_forward.1} parent=1 // pred_fallthru
      _
    // Predicated region
    $region34: #{ik_mlp_forward.1} parent=1 // pred_check
      _
    $region35: #{ik_mlp_forward.1} parent=1 // pred_check_branch
      %84 = sbr.rel (0) target = $region37
    $region36: #{ik_mlp_forward.1} parent=1 // pred_region
      _
    $region37: #{ik_mlp_forward.1} parent=1 // pred_fallthru
      _
    // Predicated region
    $region38: #{ik_mlp_forward.1} parent=1 // pred_check
      _
    $region39: #{ik_mlp_forward.1} parent=1 // pred_check_branch
      %86 = sbr.rel (0) target = $region41
    $region40: #{ik_mlp_forward.1} parent=1 // pred_region
      %87 = dma.done [#allocation3], 256
    $region41: #{ik_mlp_forward.1} parent=1 // pred_fallthru
      _
    // Predicated region
    $region42: #{ik_mlp_forward.1} parent=1 // pred_check
      _
    $region43: #{ik_mlp_forward.1} parent=1 // pred_check_branch
      %89 = sbr.rel (0) target = $region45
    $region44: #{ik_mlp_forward.1} parent=1 // pred_region
      %90 = dma.done [#allocation5], 256
    $region45: #{ik_mlp_forward.1} parent=1 // pred_fallthru
      _
    // Predicated region
    $region46: #{ik_mlp_forward.1} parent=1 // pred_check
      _
    $region47: #{ik_mlp_forward.1} parent=1 // pred_check_branch
      %92 = sbr.rel (0) target = $region49
    $region48: #{ik_mlp_forward.1} parent=1 // pred_region
      %93 = dma.done [#allocation5], 2048
    $region49: #{ik_mlp_forward.1} parent=1 // pred_fallthru
      _
    // Predicated region
    $region50: #{ik_mlp_forward.1} parent=1 // pred_check
      _
    $region51: #{ik_mlp_forward.1} parent=1 // pred_check_branch
      %95 = sbr.rel (0) target = $region53
    $region52: #{ik_mlp_forward.1} parent=1 // pred_region
      %96 = dma.done [#allocation8], 2048
    $region53: #{ik_mlp_forward.1} parent=1 // pred_fallthru
      _
    // Predicated region
    $region54: #{ik_mlp_forward.1} parent=1 // pred_check
      _
    $region55: #{ik_mlp_forward.1} parent=1 // pred_check_branch
      %98 = sbr.rel (0) target = $region57
    $region56: #{ik_mlp_forward.1} parent=1 // pred_region
      %99 = dma.done [#allocation8], 2048
    $region57: #{ik_mlp_forward.1} parent=1 // pred_fallthru
      _
    %v100 = vld [vmem:[#allocation2] sm:$0xff]
    %v101 = vld [vmem:[#allocation2 + $0x8] sm:$0xff]
    %v102 = vld [vmem:[#allocation4] sm:$0xff]
    %v103 = vld [vmem:[#allocation4 + $0x8] sm:$0xf]
    %v104 = vld [vmem:[%s2] sm:$0x1]
    %v106 = vlaneseq
    %v107 = vshrl.u32 %v106, 7
    %v108 = vsub.s32 0, %v107
    %v109 = vrot.slane %v104, %v108
    %vm111 = vcmask 97280
    %v113 = vsel %vm111, %v100, 0
    %v116 = vsel %vm111, %v101, 0
    %vm118 = vcmask 1043456
    %v120 = vsel %vm118, %v103, 0
    %122 = vmatprep.subr.mxu0 0.0
    %123 = vmatpush1.msra.mxu0 0.0
    %124 = vmatprep.subr.mxu0 0.0
    %125 = vmatpush1.msra.mxu0 0.0
    %126 = vmatprep.subr.mxu0 0.0
    %127 = vmatpush1.msra.mxu0 0.0
    %128 = vmatprep.subr.mxu0 0.0
    %129 = vmatpush1.msra.mxu0 0.0
    %130 = vmatprep.subr.mxu0 0.0
    %131 = vmatpush1.msra.mxu0 0.0
    %132 = vmatprep.subr.mxu0 0.0
    %133 = vmatpush1.msra.mxu0 0.0
    %134 = vmatprep.subr.mxu0 0.0
    %135 = vmatpush1.msra.mxu0 0.0
    %136 = vmatprep.subr.mxu0 0.0
    %137 = vmatpush1.msra.mxu0 0.0
    %138 = vmatprep.subr.mxu0 0.0
    %139 = vmatpush1.msra.mxu0 0.0
    %140 = vmatprep.subr.mxu0 0.0
    %141 = vmatpush1.msra.mxu0 0.0
    %142 = vmatprep.subr.mxu0 0.0
    %143 = vmatpush1.msra.mxu0 0.0
    %144 = vmatprep.subr.mxu0 0.0
    %145 = vmatpush1.msra.mxu0 0.0
    %146 = vmatprep.subr.mxu0 0.0
    %147 = vmatpush1.msra.mxu0 0.0
    %148 = vmatprep.subr.mxu0 0.0
    %149 = vmatpush1.msra.mxu0 0.0
    %150 = vmatprep.subr.mxu0 0.0
    %151 = vmatpush1.msra.mxu0 %v120
    %152 = vmatprep.subr.mxu0 0.0
    %153 = vmatpush1.msra.mxu0 %v102
    %154 = vmatprep.subr.mxu0 0.0
    %155 = vmatpush2.msra.mxu0 0.0
    %156 = vmatprep.subr.mxu0 0.0
    %157 = vmatpush2.msra.mxu0 0.0
    %158 = vmatprep.subr.mxu0 0.0
    %159 = vmatpush2.msra.mxu0 0.0
    %160 = vmatprep.subr.mxu0 0.0
    %161 = vmatpush2.msra.mxu0 0.0
    %162 = vmatprep.subr.mxu0 0.0
    %163 = vmatpush2.msra.mxu0 0.0
    %164 = vmatprep.subr.mxu0 0.0
    %165 = vmatpush2.msra.mxu0 0.0
    %166 = vmatprep.subr.mxu0 0.0
    %167 = vmatpush2.msra.mxu0 0.0
    %168 = vmatprep.subr.mxu0 0.0
    %169 = vmatpush2.msra.mxu0 0.0
    %170 = vmatprep.subr.mxu0 0.0
    %171 = vmatpush2.msra.mxu0 0.0
    %172 = vmatprep.subr.mxu0 0.0
    %173 = vmatpush2.msra.mxu0 0.0
    %174 = vmatprep.subr.mxu0 0.0
    %175 = vmatpush2.msra.mxu0 0.0
    %176 = vmatprep.subr.mxu0 0.0
    %177 = vmatpush2.msra.mxu0 0.0
    %178 = vmatprep.subr.mxu0 0.0
    %179 = vmatpush2.msra.mxu0 0.0
    %180 = vmatprep.subr.mxu0 0.0
    %181 = vmatpush2.msra.mxu0 0.0
    %182 = vmatprep.subr.mxu0 0.0
    %183 = vmatpush2.msra.mxu0 0.0
    %184 = vmatprep.subr.mxu0 0.0
    %185 = vmatpush2.msra.mxu0 0.0
    %186 = vmatprep.mubr.f32.mxu0 0.0
    %187 = vmatmul.mubr.f32.gmra.mxu0 %v113
    %v188 = vpop.f32.mrf.mxu0
    %v189 = vadd.f32 %v109, %v188
    %v190 = vpop.f32.mrf.mxu0
    %191 = vmatprep.mubr.f32.mxu0 0.0
    %192 = vmatmul.mubr.f32.gmra.mxu0 %v116
    %v193 = vpop.f32.mrf.mxu0
    %v194 = vadd.f32 %v109, %v193
    %v195 = vpop.f32.mrf.mxu0
    %196 = vdwg.mxu0
    %v197 = vmax.f32 %v189, 0.0
    %v198 = vmax.f32 %v194, 0.0
    %v199 = vld [vmem:[#allocation6] sm:$0xff]
    %v200 = vld [vmem:[#allocation6 + $0x8] sm:$0xff]
    %v201 = vld [vmem:[#allocation6 + $0x10] sm:$0xff]
    %v202 = vld [vmem:[#allocation6 + $0x18] sm:$0xff]
    %v203 = vld [vmem:[#allocation6 + $0x20] sm:$0xff]
    %v204 = vld [vmem:[#allocation6 + $0x28] sm:$0xff]
    %v205 = vld [vmem:[#allocation6 + $0x30] sm:$0xff]
    %v206 = vld [vmem:[#allocation6 + $0x38] sm:$0xff]
    %v207 = vld [vmem:[#allocation6 + $0x40] sm:$0xff]
    %v208 = vld [vmem:[#allocation6 + $0x48] sm:$0xff]
    %v209 = vld [vmem:[#allocation6 + $0x50] sm:$0xff]
    %v210 = vld [vmem:[#allocation6 + $0x58] sm:$0xff]
    %v211 = vld [vmem:[#allocation6 + $0x60] sm:$0xff]
    %v212 = vld [vmem:[#allocation6 + $0x68] sm:$0xff]
    %v213 = vld [vmem:[#allocation6 + $0x70] sm:$0xff]
    %v214 = vld [vmem:[#allocation6 + $0x78] sm:$0xff]
    %v215 = vld [vmem:[%s4] sm:$0x1]
    %v217 = vlaneseq
    %v218 = vshrl.u32 %v217, 7
    %v219 = vsub.s32 0, %v218
    %v220 = vrot.slane %v215, %v219
    %222 = vmatprep.subr.mxu0 0.0
    %223 = vmatpush1.msra.mxu0 %v214
    %224 = vmatprep.subr.mxu0 0.0
    %225 = vmatpush1.msra.mxu0 %v213
    %226 = vmatprep.subr.mxu0 0.0
    %227 = vmatpush1.msra.mxu0 %v212
    %228 = vmatprep.subr.mxu0 0.0
    %229 = vmatpush1.msra.mxu0 %v211
    %230 = vmatprep.subr.mxu0 0.0
    %231 = vmatpush1.msra.mxu0 %v210
    %232 = vmatprep.subr.mxu0 0.0
    %233 = vmatpush1.msra.mxu0 %v209
    %234 = vmatprep.subr.mxu0 0.0
    %235 = vmatpush1.msra.mxu0 %v208
    %236 = vmatprep.subr.mxu0 0.0
    %237 = vmatpush1.msra.mxu0 %v207
    %238 = vmatprep.subr.mxu0 0.0
    %239 = vmatpush1.msra.mxu0 %v206
    %240 = vmatprep.subr.mxu0 0.0
    %241 = vmatpush1.msra.mxu0 %v205
    %242 = vmatprep.subr.mxu0 0.0
    %243 = vmatpush1.msra.mxu0 %v204
    %244 = vmatprep.subr.mxu0 0.0
    %245 = vmatpush1.msra.mxu0 %v203
    %246 = vmatprep.subr.mxu0 0.0
    %247 = vmatpush1.msra.mxu0 %v202
    %248 = vmatprep.subr.mxu0 0.0
    %249 = vmatpush1.msra.mxu0 %v201
    %250 = vmatprep.subr.mxu0 0.0
    %251 = vmatpush1.msra.mxu0 %v200
    %252 = vmatprep.subr.mxu0 0.0
    %253 = vmatpush1.msra.mxu0 %v199
    %254 = vmatprep.subr.mxu0 0.0
    %255 = vmatpush2.msra.mxu0 0.0
    %256 = vmatprep.subr.mxu0 0.0
    %257 = vmatpush2.msra.mxu0 0.0
    %258 = vmatprep.subr.mxu0 0.0
    %259 = vmatpush2.msra.mxu0 0.0
    %260 = vmatprep.subr.mxu0 0.0
    %261 = vmatpush2.msra.mxu0 0.0
    %262 = vmatprep.subr.mxu0 0.0
    %263 = vmatpush2.msra.mxu0 0.0
    %264 = vmatprep.subr.mxu0 0.0
    %265 = vmatpush2.msra.mxu0 0.0
    %266 = vmatprep.subr.mxu0 0.0
    %267 = vmatpush2.msra.mxu0 0.0
    %268 = vmatprep.subr.mxu0 0.0
    %269 = vmatpush2.msra.mxu0 0.0
    %270 = vmatprep.subr.mxu0 0.0
    %271 = vmatpush2.msra.mxu0 0.0
    %272 = vmatprep.subr.mxu0 0.0
    %273 = vmatpush2.msra.mxu0 0.0
    %274 = vmatprep.subr.mxu0 0.0
    %275 = vmatpush2.msra.mxu0 0.0
    %276 = vmatprep.subr.mxu0 0.0
    %277 = vmatpush2.msra.mxu0 0.0
    %278 = vmatprep.subr.mxu0 0.0
    %279 = vmatpush2.msra.mxu0 0.0
    %280 = vmatprep.subr.mxu0 0.0
    %281 = vmatpush2.msra.mxu0 0.0
    %282 = vmatprep.subr.mxu0 0.0
    %283 = vmatpush2.msra.mxu0 0.0
    %284 = vmatprep.subr.mxu0 0.0
    %285 = vmatpush2.msra.mxu0 0.0
    %286 = vmatprep.mubr.f32.mxu0 0.0
    %287 = vmatmul.mubr.f32.gmra.mxu0 %v197
    %v288 = vpop.f32.mrf.mxu0
    %v289 = vadd.f32 %v220, %v288
    %v290 = vpop.f32.mrf.mxu0
    %291 = vmatprep.mubr.f32.mxu0 0.0
    %292 = vmatmul.mubr.f32.gmra.mxu0 %v198
    %v293 = vpop.f32.mrf.mxu0
    %v294 = vadd.f32 %v220, %v293
    %v295 = vpop.f32.mrf.mxu0
    %296 = vdwg.mxu0
    %v297 = vmax.f32 %v289, 0.0
    %v298 = vmax.f32 %v294, 0.0
    %v299 = vld [vmem:[#allocation7] sm:$0xff]
    %v300 = vld [vmem:[#allocation7 + $0x8] sm:$0xff]
    %v301 = vld [vmem:[#allocation7 + $0x10] sm:$0xff]
    %v302 = vld [vmem:[#allocation7 + $0x18] sm:$0xff]
    %v303 = vld [vmem:[#allocation7 + $0x20] sm:$0xff]
    %v304 = vld [vmem:[#allocation7 + $0x28] sm:$0xff]
    %v305 = vld [vmem:[#allocation7 + $0x30] sm:$0xff]
    %v306 = vld [vmem:[#allocation7 + $0x38] sm:$0xff]
    %v307 = vld [vmem:[#allocation7 + $0x40] sm:$0xff]
    %v308 = vld [vmem:[#allocation7 + $0x48] sm:$0xff]
    %v309 = vld [vmem:[#allocation7 + $0x50] sm:$0xff]
    %v310 = vld [vmem:[#allocation7 + $0x58] sm:$0xff]
    %v311 = vld [vmem:[#allocation7 + $0x60] sm:$0xff]
    %v312 = vld [vmem:[#allocation7 + $0x68] sm:$0xff]
    %v313 = vld [vmem:[#allocation7 + $0x70] sm:$0xff]
    %v314 = vld [vmem:[#allocation7 + $0x78] sm:$0xff]
    %v315 = vld [vmem:[%s6] sm:$0x1]
    %v317 = vlaneseq
    %v318 = vshrl.u32 %v317, 7
    %v319 = vsub.s32 0, %v318
    %v320 = vrot.slane %v315, %v319
    %322 = vmatprep.subr.mxu0 0.0
    %323 = vmatpush1.msra.mxu0 %v314
    %324 = vmatprep.subr.mxu0 0.0
    %325 = vmatpush1.msra.mxu0 %v313
    %326 = vmatprep.subr.mxu0 0.0
    %327 = vmatpush1.msra.mxu0 %v312
    %328 = vmatprep.subr.mxu0 0.0
    %329 = vmatpush1.msra.mxu0 %v311
    %330 = vmatprep.subr.mxu0 0.0
    %331 = vmatpush1.msra.mxu0 %v310
    %332 = vmatprep.subr.mxu0 0.0
    %333 = vmatpush1.msra.mxu0 %v309
    %334 = vmatprep.subr.mxu0 0.0
    %335 = vmatpush1.msra.mxu0 %v308
    %336 = vmatprep.subr.mxu0 0.0
    %337 = vmatpush1.msra.mxu0 %v307
    %338 = vmatprep.subr.mxu0 0.0
    %339 = vmatpush1.msra.mxu0 %v306
    %340 = vmatprep.subr.mxu0 0.0
    %341 = vmatpush1.msra.mxu0 %v305
    %342 = vmatprep.subr.mxu0 0.0
    %343 = vmatpush1.msra.mxu0 %v304
    %344 = vmatprep.subr.mxu0 0.0
    %345 = vmatpush1.msra.mxu0 %v303
    %346 = vmatprep.subr.mxu0 0.0
    %347 = vmatpush1.msra.mxu0 %v302
    %348 = vmatprep.subr.mxu0 0.0
    %349 = vmatpush1.msra.mxu0 %v301
    %350 = vmatprep.subr.mxu0 0.0
    %351 = vmatpush1.msra.mxu0 %v300
    %352 = vmatprep.subr.mxu0 0.0
    %353 = vmatpush1.msra.mxu0 %v299
    %354 = vmatprep.subr.mxu0 0.0
    %355 = vmatpush2.msra.mxu0 0.0
    %356 = vmatprep.subr.mxu0 0.0
    %357 = vmatpush2.msra.mxu0 0.0
    %358 = vmatprep.subr.mxu0 0.0
    %359 = vmatpush2.msra.mxu0 0.0
    %360 = vmatprep.subr.mxu0 0.0
    %361 = vmatpush2.msra.mxu0 0.0
    %362 = vmatprep.subr.mxu0 0.0
    %363 = vmatpush2.msra.mxu0 0.0
    %364 = vmatprep.subr.mxu0 0.0
    %365 = vmatpush2.msra.mxu0 0.0
    %366 = vmatprep.subr.mxu0 0.0
    %367 = vmatpush2.msra.mxu0 0.0
    %368 = vmatprep.subr.mxu0 0.0
    %369 = vmatpush2.msra.mxu0 0.0
    %370 = vmatprep.subr.mxu0 0.0
    %371 = vmatpush2.msra.mxu0 0.0
    %372 = vmatprep.subr.mxu0 0.0
    %373 = vmatpush2.msra.mxu0 0.0
    %374 = vmatprep.subr.mxu0 0.0
    %375 = vmatpush2.msra.mxu0 0.0
    %376 = vmatprep.subr.mxu0 0.0
    %377 = vmatpush2.msra.mxu0 0.0
    %378 = vmatprep.subr.mxu0 0.0
    %379 = vmatpush2.msra.mxu0 0.0
    %380 = vmatprep.subr.mxu0 0.0
    %381 = vmatpush2.msra.mxu0 0.0
    %382 = vmatprep.subr.mxu0 0.0
    %383 = vmatpush2.msra.mxu0 0.0
    %384 = vmatprep.subr.mxu0 0.0
    %385 = vmatpush2.msra.mxu0 0.0
    %386 = vmatprep.mubr.f32.mxu0 0.0
    %387 = vmatmul.mubr.f32.gmra.mxu0 %v297
    %v388 = vpop.f32.mrf.mxu0
    %v389 = vadd.f32 %v320, %v388
    %v390 = vpop.f32.mrf.mxu0
    %391 = vmatprep.mubr.f32.mxu0 0.0
    %392 = vmatmul.mubr.f32.gmra.mxu0 %v298
    %v393 = vpop.f32.mrf.mxu0
    %v394 = vadd.f32 %v320, %v393
    %v395 = vpop.f32.mrf.mxu0
    %396 = vdwg.mxu0
    %v397 = vmax.f32 %v389, 0.0
    %v398 = vmax.f32 %v394, 0.0
    %v399 = vld [vmem:[#allocation9] sm:$0xff]
    %v400 = vld [vmem:[#allocation9 + $0x8] sm:$0xff]
    %v401 = vld [vmem:[#allocation9 + $0x10] sm:$0xff]
    %v402 = vld [vmem:[#allocation9 + $0x18] sm:$0xff]
    %v403 = vld [vmem:[#allocation9 + $0x20] sm:$0xff]
    %v404 = vld [vmem:[#allocation9 + $0x28] sm:$0xff]
    %v405 = vld [vmem:[#allocation9 + $0x30] sm:$0xff]
    %v406 = vld [vmem:[#allocation9 + $0x38] sm:$0xff]
    %v407 = vld [vmem:[#allocation9 + $0x40] sm:$0xff]
    %v408 = vld [vmem:[#allocation9 + $0x48] sm:$0xff]
    %v409 = vld [vmem:[#allocation9 + $0x50] sm:$0xff]
    %v410 = vld [vmem:[#allocation9 + $0x58] sm:$0xff]
    %v411 = vld [vmem:[#allocation9 + $0x60] sm:$0xff]
    %v412 = vld [vmem:[#allocation9 + $0x68] sm:$0xff]
    %v413 = vld [vmem:[#allocation9 + $0x70] sm:$0xff]
    %v414 = vld [vmem:[#allocation9 + $0x78] sm:$0xff]
    %v415 = vld [vmem:[%s8] sm:$0x1]
    %v417 = vlaneseq
    %v418 = vshrl.u32 %v417, 7
    %v419 = vsub.s32 0, %v418
    %v420 = vrot.slane %v415, %v419
    %422 = vmatprep.subr.mxu0 0.0
    %423 = vmatpush1.msra.mxu0 %v414
    %424 = vmatprep.subr.mxu0 0.0
    %425 = vmatpush1.msra.mxu0 %v413
    %426 = vmatprep.subr.mxu0 0.0
    %427 = vmatpush1.msra.mxu0 %v412
    %428 = vmatprep.subr.mxu0 0.0
    %429 = vmatpush1.msra.mxu0 %v411
    %430 = vmatprep.subr.mxu0 0.0
    %431 = vmatpush1.msra.mxu0 %v410
    %432 = vmatprep.subr.mxu0 0.0
    %433 = vmatpush1.msra.mxu0 %v409
    %434 = vmatprep.subr.mxu0 0.0
    %435 = vmatpush1.msra.mxu0 %v408
    %436 = vmatprep.subr.mxu0 0.0
    %437 = vmatpush1.msra.mxu0 %v407
    %438 = vmatprep.subr.mxu0 0.0
    %439 = vmatpush1.msra.mxu0 %v406
    %440 = vmatprep.subr.mxu0 0.0
    %441 = vmatpush1.msra.mxu0 %v405
    %442 = vmatprep.subr.mxu0 0.0
    %443 = vmatpush1.msra.mxu0 %v404
    %444 = vmatprep.subr.mxu0 0.0
    %445 = vmatpush1.msra.mxu0 %v403
    %446 = vmatprep.subr.mxu0 0.0
    %447 = vmatpush1.msra.mxu0 %v402
    %448 = vmatprep.subr.mxu0 0.0
    %449 = vmatpush1.msra.mxu0 %v401
    %450 = vmatprep.subr.mxu0 0.0
    %451 = vmatpush1.msra.mxu0 %v400
    %452 = vmatprep.subr.mxu0 0.0
    %453 = vmatpush1.msra.mxu0 %v399
    %454 = vmatprep.subr.mxu0 0.0
    %455 = vmatpush2.msra.mxu0 0.0
    %456 = vmatprep.subr.mxu0 0.0
    %457 = vmatpush2.msra.mxu0 0.0
    %458 = vmatprep.subr.mxu0 0.0
    %459 = vmatpush2.msra.mxu0 0.0
    %460 = vmatprep.subr.mxu0 0.0
    %461 = vmatpush2.msra.mxu0 0.0
    %462 = vmatprep.subr.mxu0 0.0
    %463 = vmatpush2.msra.mxu0 0.0
    %464 = vmatprep.subr.mxu0 0.0
    %465 = vmatpush2.msra.mxu0 0.0
    %466 = vmatprep.subr.mxu0 0.0
    %467 = vmatpush2.msra.mxu0 0.0
    %468 = vmatprep.subr.mxu0 0.0
    %469 = vmatpush2.msra.mxu0 0.0
    %470 = vmatprep.subr.mxu0 0.0
    %471 = vmatpush2.msra.mxu0 0.0
    %472 = vmatprep.subr.mxu0 0.0
    %473 = vmatpush2.msra.mxu0 0.0
    %474 = vmatprep.subr.mxu0 0.0
    %475 = vmatpush2.msra.mxu0 0.0
    %476 = vmatprep.subr.mxu0 0.0
    %477 = vmatpush2.msra.mxu0 0.0
    %478 = vmatprep.subr.mxu0 0.0
    %479 = vmatpush2.msra.mxu0 0.0
    %480 = vmatprep.subr.mxu0 0.0
    %481 = vmatpush2.msra.mxu0 0.0
    %482 = vmatprep.subr.mxu0 0.0
    %483 = vmatpush2.msra.mxu0 0.0
    %484 = vmatprep.subr.mxu0 0.0
    %485 = vmatpush2.msra.mxu0 0.0
    %486 = vmatprep.mubr.f32.mxu0 0.0
    %487 = vmatmul.mubr.f32.gmra.mxu0 %v397
    %v488 = vpop.f32.mrf.mxu0
    %v489 = vadd.f32 %v420, %v488
    %v490 = vpop.f32.mrf.mxu0
    %491 = vmatprep.mubr.f32.mxu0 0.0
    %492 = vmatmul.mubr.f32.gmra.mxu0 %v398
    %v493 = vpop.f32.mrf.mxu0
    %v494 = vadd.f32 %v420, %v493
    %v495 = vpop.f32.mrf.mxu0
    %496 = vdwg.mxu0
    %vm497 = vcmask 64512
    %498 = vst.msk [vmem:[%s9] sm:$0xff] %vm497, %v489
    %499 = vst.msk [vmem:[%s9 + $0x8] sm:$0xff] %vm497, %v494
    // Predicated region
    $region58: #{ik_mlp_forward.1} parent=1 // pred_check
      _
    $region59: #{ik_mlp_forward.1} parent=1 // pred_check_branch
      %501 = sbr.rel (0) target = $region61
    $region60: #{ik_mlp_forward.1} parent=1 // pred_region
      _
    $region61: #{ik_mlp_forward.1} parent=1 // pred_fallthru
      _
    // Predicated region
    $region62: #{ik_mlp_forward.1} parent=1 // pred_check
      _
    $region63: #{ik_mlp_forward.1} parent=1 // pred_check_branch
      %503 = sbr.rel (0) target = $region65
    $region64: #{ik_mlp_forward.1} parent=1 // pred_region
      _
    $region65: #{ik_mlp_forward.1} parent=1 // pred_fallthru
      _
    %504 = vsyncpa [#allocation3], 1
    %505 = vsyncpa [#allocation5], 1
    %506 = vsyncpa [#allocation8], 1

</llo_original>
